<compile_context>
chip_gen: v7x
topology: tpu7x:2x2x1
jax: 0.10.0
libtpu: 0.0.40
codegen_flags: <defaults>
</compile_context>

<pallas_src>
import math
from functools import partial

import jax
import jax.numpy as jnp
from jax.experimental import pallas as pl
from jax.experimental.pallas import tpu as pltpu


def _nnbase_kernel(x_ref, w_ref, b_ref, o_ref, *, c_in, n_win, n_pix):
    """One grid step processes one whole image.

    x_ref : (1, C_in, P)       P = KH*KW*OH*OW pixels, window-offset-major
    w_ref : (C_out, C_in)      fused 1x1-conv weight (transposed)
    b_ref : (C_out, 1)         fused bias
    o_ref : (1, C_out, OH*OW)  pooled output, already in torch NCHW-flatten order
    """
    x = x_ref[0]                          # (C_in, P)   pixels on lanes
    w = w_ref[...]                        # (C_out, C_in)

    # Fused 1x1 conv: y[co, p] = sum_ci w[co, ci] * x[ci, p] + b[co].
    # C_in is tiny (4), so do it as C_in lane-dense VPU multiply-adds
    # (exact f32; an MXU push buys nothing for K=4 per the perf review).
    y = w[:, 0:1] * x[0:1, :] + b_ref[...]            # (C_out, P)
    for c in range(1, c_in):
        y = y + w[:, c:c + 1] * x[c:c + 1, :]

    # Adaptive max pool: pixels were pre-permuted so each (kh, kw) window
    # offset is a contiguous n_pix-lane block -> pure elementwise maxima.
    pooled = y[:, 0:n_pix]
    for t in range(1, n_win):
        pooled = jnp.maximum(pooled, y[:, t * n_pix:(t + 1) * n_pix])

    o_ref[0] = pooled                     # (C_out, OH*OW), lane-dense store


@partial(jax.jit, static_argnames=("map_size",))
def nnbase_forward(x_nchw, params, map_size):
    """Pallas implementation of NNBase.forward.

    x_nchw: (N, C_in, H, W) float32 (PyTorch layout)
    returns: (N, out_size * OH * OW) float32, identical semantics to the module.
    """
    N, C_in, H, W = x_nchw.shape
    OH, OW = map_size
    # TODO(synk): AdaptiveMaxPool2d with non-divisible windows (H % OH != 0) is
    # not implemented; only the uniform-window case (covers identity too).
    assert H % OH == 0 and W % OW == 0
    KH, KW = H // OH, W // OW
    n_win, n_pix = KH * KW, OH * OW

    w1, b1, w2, b2, w3, b3 = params
    C_out = w3.shape[1]
    P = jax.lax.Precision.HIGHEST

    # Fuse the three bias-only 1x1 convs into one affine map (valid ONLY because
    # the nn.Sequential has no activations between the convs).
    w_f = jnp.dot(jnp.dot(w1, w2, precision=P), w3, precision=P)          # (C_in, C_out)
    b_f = (jnp.dot(jnp.dot(b1, w2, precision=P), w3, precision=P)
           + jnp.dot(b2, w3, precision=P) + b3)                           # (1, C_out)
    wT = w_f.T                                                            # (C_out, C_in)
    bT = b_f.T                                                            # (C_out, 1)

    # Pixels on lanes; reorder pixels so each (kh, kw) window offset is a
    # contiguous block of OH*OW pixels (wrapper-side layout plumbing, done once).
    x = x_nchw.astype(jnp.float32).reshape(N, C_in, OH, KH, OW, KW)
    x = jnp.transpose(x, (0, 1, 3, 5, 2, 4)).reshape(N, C_in, n_win * n_pix)

    kern = partial(_nnbase_kernel, c_in=C_in, n_win=n_win, n_pix=n_pix)

    out = pl.pallas_call(
        kern,
        out_shape=jax.ShapeDtypeStruct((N, C_out, n_pix), jnp.float32),
        grid_spec=pltpu.PrefetchScalarGridSpec(
            num_scalar_prefetch=0,
            grid=(N,),
            in_specs=[
                pl.BlockSpec((1, C_in, n_win * n_pix), lambda n: (n, 0, 0)),
                pl.BlockSpec((C_out, C_in), lambda n: (0, 0)),
                pl.BlockSpec((C_out, 1), lambda n: (0, 0)),
            ],
            out_specs=pl.BlockSpec((1, C_out, n_pix), lambda n: (n, 0, 0)),
        ),
        compiler_params=pltpu.CompilerParams(
            dimension_semantics=("parallel",)),
    )(x, wT, bT)

    # (N, C_out, OH*OW) is exactly torch's Flatten of the NCHW pooled tensor.
    return out.reshape(N, C_out * n_pix)


def init_params(key, input_channel, out_size):
    """Deterministic synthetic init mirroring the module: orthogonal(gain=relu), zero bias.
    Conv weights are (out, in, 1, 1) in torch; stored here transposed as (in, out)
    so the 1x1 conv is x @ W."""
    gain = math.sqrt(2.0)                       # nn.init.calculate_gain('relu')
    ortho = jax.nn.initializers.orthogonal(scale=gain)
    k1, k2, k3 = jax.random.split(key, 3)
    w1 = ortho(k1, (64, input_channel), jnp.float32).T   # (C_in, 64)
    w2 = ortho(k2, (32, 64), jnp.float32).T              # (64, 32)
    w3 = ortho(k3, (out_size, 32), jnp.float32).T        # (32, out_size)
    b1 = jnp.zeros((1, 64), jnp.float32)
    b2 = jnp.zeros((1, 32), jnp.float32)
    b3 = jnp.zeros((1, out_size), jnp.float32)
    return (w1, b1, w2, b2, w3, b3)


if __name__ == "__main__":
    key = jax.random.PRNGKey(0)
    kx, kp = jax.random.split(key)

    # NNBase(map_size=[8, 8], input_channel=4, hidden_size=32, out_size=8)
    # (hidden_size is unused by the module's conv stack, which hard-codes 64, 32)
    N, C_in, H, W = 2, 4, 16, 16
    map_size = (8, 8)
    out_size = 8

    x = jax.random.normal(kx, (N, C_in, H, W), jnp.float32)
    params = init_params(kp, C_in, out_size)

    y = nnbase_forward(x, params, map_size)
    y = jax.block_until_ready(y)

    # Pure-JAX reference of the exact (unfused) forward pass.
    P = jax.lax.Precision.HIGHEST
    w1, b1, w2, b2, w3, b3 = params
    xr = jnp.transpose(x, (0, 2, 3, 1))
    h = jnp.matmul(xr, w1, precision=P) + b1
    h = jnp.matmul(h, w2, precision=P) + b2
    h = jnp.matmul(h, w3, precision=P) + b3            # (N, H, W, C_out)
    h = jnp.transpose(h, (0, 3, 1, 2))                 # NCHW
    OH, OW = map_size
    ref = h.reshape(N, out_size, OH, H // OH, OW, W // OW).max(axis=(3, 5)).reshape(N, -1)

    assert y.shape == (N, out_size * OH * OW), y.shape
    assert jnp.allclose(y, ref, atol=1e-4, rtol=1e-4)
    print("KERNEL_OK")
</pallas_src>

<mosaic_0001>
module attributes {stable_mosaic.version = 11 : i64} {
  func.func @_nnbase_kernel(%arg0: i32, %arg1: memref<1x4x256xf32, #tpu.memory_space<vmem>>, %arg2: memref<8x4xf32, #tpu.memory_space<vmem>>, %arg3: memref<8x1xf32, #tpu.memory_space<vmem>>, %arg4: memref<1x8x64xf32, #tpu.memory_space<vmem>>) attributes {dimension_semantics = [#tpu.dimension_semantics<parallel>], iteration_bounds = array<i64: 2>, scalar_prefetch = 0 : i64, scratch_operands = 0 : i64, tpu.core_type = #tpu.core_type<tc>, window_params = [{transform_indices = @transform_0, window_bounds = array<i64: 1, 4, 256>}, {pipeline_mode = #tpu.pipeline_mode<synchronous>, transform_indices = @transform_1, window_bounds = array<i64: 8, 4>}, {pipeline_mode = #tpu.pipeline_mode<synchronous>, transform_indices = @transform_2, window_bounds = array<i64: 8, 1>}, {transform_indices = @transform_3, window_bounds = array<i64: 1, 8, 64>}]} {
    %c0 = arith.constant 0 : index
    %c0_0 = arith.constant 0 : index
    %c0_1 = arith.constant 0 : index
    %0 = vector.load %arg1[%c0, %c0_0, %c0_1] : memref<1x4x256xf32, #tpu.memory_space<vmem>>, vector<1x4x256xf32>
    %1 = vector.shape_cast %0 : vector<1x4x256xf32> to vector<4x256xf32>
    %c0_2 = arith.constant 0 : index
    %c0_3 = arith.constant 0 : index
    %2 = vector.load %arg2[%c0_2, %c0_3] : memref<8x4xf32, #tpu.memory_space<vmem>>, vector<8x4xf32>
    %3 = vector.extract_strided_slice %2 {offsets = [0, 0], sizes = [8, 1], strides = [1, 1]} : vector<8x4xf32> to vector<8x1xf32>
    %4 = vector.extract_strided_slice %1 {offsets = [0, 0], sizes = [1, 256], strides = [1, 1]} : vector<4x256xf32> to vector<1x256xf32>
    %5 = vector.broadcast %3 : vector<8x1xf32> to vector<8x256xf32>
    %6 = vector.broadcast %4 : vector<1x256xf32> to vector<8x256xf32>
    %7 = arith.mulf %5, %6 : vector<8x256xf32>
    %c0_4 = arith.constant 0 : index
    %c0_5 = arith.constant 0 : index
    %8 = vector.load %arg3[%c0_4, %c0_5] : memref<8x1xf32, #tpu.memory_space<vmem>>, vector<8x1xf32>
    %9 = vector.broadcast %8 : vector<8x1xf32> to vector<8x256xf32>
    %10 = arith.addf %7, %9 : vector<8x256xf32>
    %11 = vector.extract_strided_slice %2 {offsets = [0, 1], sizes = [8, 1], strides = [1, 1]} : vector<8x4xf32> to vector<8x1xf32>
    %12 = vector.extract_strided_slice %1 {offsets = [1, 0], sizes = [1, 256], strides = [1, 1]} : vector<4x256xf32> to vector<1x256xf32>
    %13 = vector.broadcast %11 : vector<8x1xf32> to vector<8x256xf32>
    %14 = vector.broadcast %12 : vector<1x256xf32> to vector<8x256xf32>
    %15 = arith.mulf %13, %14 : vector<8x256xf32>
    %16 = arith.addf %10, %15 : vector<8x256xf32>
    %17 = vector.extract_strided_slice %2 {offsets = [0, 2], sizes = [8, 1], strides = [1, 1]} : vector<8x4xf32> to vector<8x1xf32>
    %18 = vector.extract_strided_slice %1 {offsets = [2, 0], sizes = [1, 256], strides = [1, 1]} : vector<4x256xf32> to vector<1x256xf32>
    %19 = vector.broadcast %17 : vector<8x1xf32> to vector<8x256xf32>
    %20 = vector.broadcast %18 : vector<1x256xf32> to vector<8x256xf32>
    %21 = arith.mulf %19, %20 : vector<8x256xf32>
    %22 = arith.addf %16, %21 : vector<8x256xf32>
    %23 = vector.extract_strided_slice %2 {offsets = [0, 3], sizes = [8, 1], strides = [1, 1]} : vector<8x4xf32> to vector<8x1xf32>
    %24 = vector.extract_strided_slice %1 {offsets = [3, 0], sizes = [1, 256], strides = [1, 1]} : vector<4x256xf32> to vector<1x256xf32>
    %25 = vector.broadcast %23 : vector<8x1xf32> to vector<8x256xf32>
    %26 = vector.broadcast %24 : vector<1x256xf32> to vector<8x256xf32>
    %27 = arith.mulf %25, %26 : vector<8x256xf32>
    %28 = arith.addf %22, %27 : vector<8x256xf32>
    %29 = vector.extract_strided_slice %28 {offsets = [0, 0], sizes = [8, 64], strides = [1, 1]} : vector<8x256xf32> to vector<8x64xf32>
    %30 = vector.extract_strided_slice %28 {offsets = [0, 64], sizes = [8, 64], strides = [1, 1]} : vector<8x256xf32> to vector<8x64xf32>
    %31 = arith.maximumf %29, %30 : vector<8x64xf32>
    %32 = vector.extract_strided_slice %28 {offsets = [0, 128], sizes = [8, 64], strides = [1, 1]} : vector<8x256xf32> to vector<8x64xf32>
    %33 = arith.maximumf %31, %32 : vector<8x64xf32>
    %34 = vector.extract_strided_slice %28 {offsets = [0, 192], sizes = [8, 64], strides = [1, 1]} : vector<8x256xf32> to vector<8x64xf32>
    %35 = arith.maximumf %33, %34 : vector<8x64xf32>
    %c0_6 = arith.constant 0 : index
    %c0_7 = arith.constant 0 : index
    %c0_8 = arith.constant 0 : index
    %36 = vector.load %arg4[%c0_6, %c0_7, %c0_8] : memref<1x8x64xf32, #tpu.memory_space<vmem>>, vector<1x8x64xf32>
    %37 = vector.shape_cast %36 : vector<1x8x64xf32> to vector<8x64xf32>
    %38 = vector.shape_cast %35 : vector<8x64xf32> to vector<1x8x64xf32>
    tpu.vector_store %arg4[%c0_6, %c0_7, %c0_8], %38 {strides = array<i32>} : memref<1x8x64xf32, #tpu.memory_space<vmem>>, vector<1x8x64xf32>,
    return
  }
  func.func @transform_0(%arg0: i32) -> (i32, i32, i32) {
    %c0_i32 = arith.constant 0 : i32
    %c0_i32_0 = arith.constant 0 : i32
    %c0_i32_1 = arith.constant 0 : i32
    return %arg0, %c0_i32, %c0_i32_0 : i32, i32, i32
  }
  func.func @transform_1(%arg0: i32) -> (i32, i32) {
    %c0_i32 = arith.constant 0 : i32
    %c0_i32_0 = arith.constant 0 : i32
    %c0_i32_1 = arith.constant 0 : i32
    return %c0_i32, %c0_i32_0 : i32, i32
  }
  func.func @transform_2(%arg0: i32) -> (i32, i32) {
    %c0_i32 = arith.constant 0 : i32
    %c0_i32_0 = arith.constant 0 : i32
    %c0_i32_1 = arith.constant 0 : i32
    return %c0_i32, %c0_i32_0 : i32, i32
  }
  func.func @transform_3(%arg0: i32) -> (i32, i32, i32) {
    %c0_i32 = arith.constant 0 : i32
    %c0_i32_0 = arith.constant 0 : i32
    %c0_i32_1 = arith.constant 0 : i32
    return %arg0, %c0_i32, %c0_i32_0 : i32, i32, i32
  }
}

</mosaic_0001>

<llo_original>
// kernel: nnbase_forward.1
$region0: #{nnbase_forward.1}
  #allocation0 [shape = 'u32[]', space=smem, size = 0x4, offset = 0x4, fixed_abs, tag = 'smem constant byte address 0x4 - core index']
  #allocation1 [shape = 'u32[144,128]{1,0:T(1,128)}', space=vmem, size = 0x12000, scoped, tag = 'internal scratch']
  %s0 = inlined_call_operand.vmem [shape: f32[2,4,256], index: 0, kind: input, shape index: {}]
  %s1 = inlined_call_operand.vmem [shape: f32[8,4], index: 1, kind: input, shape index: {}]
  %s2 = inlined_call_operand.vmem [shape: f32[8,1], index: 2, kind: input, shape index: {}]
  %s3 = inlined_call_operand.vmem [shape: f32[2,8,64], index: 3, kind: output, shape index: {}]
  %s4 = sld [smem:[#allocation0]]
  $region45: #{nnbase_forward.1} parent=0
    _
  %s6 = ssub.s32 1, %s4
  %s7 = scalar_select 0, %s6, %s4
  loop: start=0, step=1, limit=4
  $region2: #{nnbase_forward.1} parent=0 // loop_pre_header
    _
  $region3: #{nnbase_forward.1} parent=0 // loop_header
    %s9 = sphi 0, %s13
    %p10 = scmp.ge.s32.totalorder %s9, 4
    %s19 = sphi 0, %s21
    %s22 = sphi 0, %s19
    %s23 = sphi 0, %s22
    %s39 = sphi 0, %s23
    %s43 = sphi 0, %s43
    %s45 = sphi 0, %s43
    %s46 = sphi 0, %s45
    %s60 = sphi 0, %s46
    %s64 = sphi 0, %s64
    %s66 = sphi 0, %s64
    %s67 = sphi 0, %s66
    %s81 = sphi 0, %s67
    %s87 = sphi 0, %s89
    %s90 = sphi 0, %s87
    %s91 = sphi 0, %s90
    %s107 = sphi 0, %s91
  $region4: #{nnbase_forward.1} parent=0 // loop_header_branch
    %12 = sbr.rel (%p10) target = $region8
  $region5: #{nnbase_forward.1} parent=0 // loop_body
    %s14 = ssub.s32 %s9, 1
    %s15 = ssub.s32 %s9, 2
    %s16 = sadd.s32 %s9, 1
    %s17 = ssub.s32 %s9, %s16
    %p18 = scmp.eq.s32.totalorder %s17, 0
    %s20 = sadd.s32 %s19, 1
    %s21 = scalar_select %p18, %s19, %s20
    %p24 = pneg %p18
    %p25 = scmp.eq.s32.totalorder %s9, 1
    %p26 = por %p24, %p25
    %p27 = scmp.ne.s32.totalorder %s19, %s22
    %p28 = scmp.eq.s32.totalorder %s9, 0
    %p29 = por %p27, %p28
    %p30 = scmp.ne.s32.totalorder %s19, %s22
    %p31 = scmp.eq.s32.totalorder %s14, 1
    %p32 = por %p30, %p31
    %p33 = scmp.ne.s32.totalorder %s22, %s23
    %p34 = scmp.eq.s32.totalorder %s14, 0
    %p35 = por %p33, %p34
    %p36 = scmp.ne.s32.totalorder %s22, %s23
    %p37 = scmp.eq.s32.totalorder %s15, 1
    %p38 = por %p36, %p37
    %p40 = scmp.ne.s32.totalorder %s23, %s39
    %p41 = scmp.eq.s32.totalorder %s15, 0
    %p42 = por %p40, %p41
    %s44 = sadd.s32 %s43, 1
    %p47 = scmp.eq.s32.totalorder %s9, 1
    %p48 = scmp.ne.s32.totalorder %s43, %s45
    %p49 = scmp.eq.s32.totalorder %s9, 0
    %p50 = por %p48, %p49
    %p51 = scmp.ne.s32.totalorder %s43, %s45
    %p52 = scmp.eq.s32.totalorder %s14, 1
    %p53 = por %p51, %p52
    %p54 = scmp.ne.s32.totalorder %s45, %s46
    %p55 = scmp.eq.s32.totalorder %s14, 0
    %p56 = por %p54, %p55
    %p57 = scmp.ne.s32.totalorder %s45, %s46
    %p58 = scmp.eq.s32.totalorder %s15, 1
    %p59 = por %p57, %p58
    %p61 = scmp.ne.s32.totalorder %s46, %s60
    %p62 = scmp.eq.s32.totalorder %s15, 0
    %p63 = por %p61, %p62
    %s65 = sadd.s32 %s64, 1
    %p68 = scmp.eq.s32.totalorder %s9, 1
    %p69 = scmp.ne.s32.totalorder %s64, %s66
    %p70 = scmp.eq.s32.totalorder %s9, 0
    %p71 = por %p69, %p70
    %p72 = scmp.ne.s32.totalorder %s64, %s66
    %p73 = scmp.eq.s32.totalorder %s14, 1
    %p74 = por %p72, %p73
    %p75 = scmp.ne.s32.totalorder %s66, %s67
    %p76 = scmp.eq.s32.totalorder %s14, 0
    %p77 = por %p75, %p76
    %p78 = scmp.ne.s32.totalorder %s66, %s67
    %p79 = scmp.eq.s32.totalorder %s15, 1
    %p80 = por %p78, %p79
    %p82 = scmp.ne.s32.totalorder %s67, %s81
    %p83 = scmp.eq.s32.totalorder %s15, 0
    %p84 = por %p82, %p83
    %s85 = ssub.s32 %s9, %s16
    %p86 = scmp.eq.s32.totalorder %s85, 0
    %s88 = sadd.s32 %s87, 1
    %s89 = scalar_select %p86, %s87, %s88
    %p92 = pneg %p86
    %p93 = scmp.eq.s32.totalorder %s9, 1
    %p94 = por %p92, %p93
    %p95 = scmp.ne.s32.totalorder %s87, %s90
    %p96 = scmp.eq.s32.totalorder %s9, 0
    %p97 = por %p95, %p96
    %p98 = scmp.ne.s32.totalorder %s87, %s90
    %p99 = scmp.eq.s32.totalorder %s14, 1
    %p100 = por %p98, %p99
    %p101 = scmp.ne.s32.totalorder %s90, %s91
    %p102 = scmp.eq.s32.totalorder %s14, 0
    %p103 = por %p101, %p102
    %p104 = scmp.ne.s32.totalorder %s90, %s91
    %p105 = scmp.eq.s32.totalorder %s15, 1
    %p106 = por %p104, %p105
    %p108 = scmp.ne.s32.totalorder %s91, %s107
    %p109 = scmp.eq.s32.totalorder %s15, 0
    %p110 = por %p108, %p109
    %p111 = scmp.le.s32.totalorder 1, %s9
    %p112 = scmp.lt.s32.totalorder %s9, 3
    %p113 = pnand %p111, %p112
    %p114 = pneg %p113
    // Predicated region
    $region9: #{nnbase_forward.1} parent=5 // pred_check
      _
    $region10: #{nnbase_forward.1} parent=5 // pred_check_branch
      %116 = sbr.rel (%p113) target = $region12
    $region11: #{nnbase_forward.1} parent=5 // pred_region
      %s117 = ssub.s32 %s9, 1
      // Predicated region
      $region13: #{nnbase_forward.1} parent=11 // pred_check
        %p118 = pneg %p56
      $region14: #{nnbase_forward.1} parent=11 // pred_check_branch
        %120 = sbr.rel (%p118) target = $region16
      $region15: #{nnbase_forward.1} parent=11 // pred_region
        _
      $region16: #{nnbase_forward.1} parent=11 // pred_fallthru
        _
      // Predicated region
      $region17: #{nnbase_forward.1} parent=11 // pred_check
        %p121 = pneg %p77
      $region18: #{nnbase_forward.1} parent=11 // pred_check_branch
        %123 = sbr.rel (%p121) target = $region20
      $region19: #{nnbase_forward.1} parent=11 // pred_region
        _
      $region20: #{nnbase_forward.1} parent=11 // pred_fallthru
        _
    $region12: #{nnbase_forward.1} parent=5 // pred_fallthru
      _
    %p124 = scmp.lt.s32.totalorder %s9, 2
    // Predicated region
    $region21: #{nnbase_forward.1} parent=5 // pred_check
      %p125 = pneg %p124
    $region22: #{nnbase_forward.1} parent=5 // pred_check_branch
      %127 = sbr.rel (%p125) target = $region24
    $region23: #{nnbase_forward.1} parent=5 // pred_region
      // Predicated region
      $region25: #{nnbase_forward.1} parent=23 // pred_check
        %p128 = pneg %p29
      $region26: #{nnbase_forward.1} parent=23 // pred_check_branch
        %130 = sbr.rel (%p128) target = $region28
      $region27: #{nnbase_forward.1} parent=23 // pred_region
        %p131 = scmp.lt.s32.totalorder %s9, 1
        %s132 = scalar_select %p131, %s9, 1
        %s133 = smul.addr %s132, 2
        %s134 = smul.addr %s133, 4
        %s135 = scalar_lea.vmem %s0, %s134
      $region28: #{nnbase_forward.1} parent=23 // pred_fallthru
        _
    $region24: #{nnbase_forward.1} parent=5 // pred_fallthru
      _
    %p136 = scmp.le.s32.totalorder 1, %s9
    %p137 = scmp.lt.s32.totalorder %s9, 3
    %p138 = pnand %p136, %p137
    %p139 = pneg %p138
    // Predicated region
    $region29: #{nnbase_forward.1} parent=5 // pred_check
      _
    $region30: #{nnbase_forward.1} parent=5 // pred_check_branch
      %141 = sbr.rel (%p138) target = $region32
    $region31: #{nnbase_forward.1} parent=5 // pred_region
      %s142 = ssub.s32 %s9, 1
      %p143 = scmp.lt.s32.totalorder %s14, 1
      %s144 = scalar_select %p143, %s14, 1
      %s145 = smul.addr %s144, 2
      %s146 = smul.addr %s145, 4
      %s147 = scalar_lea.vmem %s0, %s146
      %p148 = pneg %p35
      %p149 = pneg %p32
      %p150 = pneg %p56
      %p151 = pneg %p53
      %p152 = pneg %p77
      %p153 = pneg %p74
      %p154 = pneg %p103
      %p155 = pneg %p100
      %p156 = scmp.lt.s32.totalorder %s14, 1
      %s157 = scalar_select %p156, %s14, 1
      %s158 = smul.addr %s157, 8
      %s159 = scalar_lea.vmem %s3, %s158
      %p160 = scmp.lt.s32.totalorder %s14, 1
      %s161 = scalar_select %p160, %s14, 1
      %s162 = smul.addr %s161, 2
      %s163 = smul.addr %s162, 4
      %s164 = scalar_lea.vmem %s0, %s163
      %p165 = scmp.lt.s32.totalorder %s14, 1
      %s166 = scalar_select %p165, %s14, 1
      %s167 = smul.addr %s166, 8
      %s168 = scalar_lea.vmem %s3, %s167
      %v169 = vld [vmem:[%s164] sm:$0xff]
      %v170 = vld [vmem:[%s1] sm:$0xff]
      %172 = vset.pattern.permute.xlu0 0
      %173 = vperm.xlu0 %172, %v170
      %v174 = vpop.permute.xlu0 %173
      %v177 = vlaneseq
      %v178 = vshrl.u32 %v177, 7
      %v179 = vsub.s32 0, %v178
      %v180 = vrot.slane %v169, %v179
      %v181 = vlaneseq
      %v182 = vshrl.u32 %v181, 7
      %v183 = vsub.s32 4, %v182
      %v184 = vrot.slane %v169, %v183
      %v187 = vlaneseq
      %v188 = vshrl.u32 %v187, 7
      %v189 = vsub.s32 0, %v188
      %v190 = vrot.slane %v180, %v189
      %v191 = vlaneseq
      %v192 = vshrl.u32 %v191, 7
      %v193 = vsub.s32 0, %v192
      %v194 = vrot.slane %v184, %v193
      %v195 = vmul.f32 %v174, %v190
      %v196 = vmul.f32 %v174, %v194
      %v197 = vld [vmem:[%s2] sm:$0xff]
      %199 = vset.pattern.permute.xlu0 0
      %200 = vperm.xlu0 %199, %v197
      %v201 = vpop.permute.xlu0 %200
      %v203 = vadd.f32 %v195, %v201
      %v204 = vadd.f32 %v196, %v201
      %205 = vset.pattern.permute.xlu0 1
      %206 = vperm.xlu0 %205, %v170
      %v207 = vpop.permute.xlu0 %206
      %v209 = vlaneseq
      %v210 = vshrl.u32 %v209, 7
      %v211 = vsub.s32 1, %v210
      %v212 = vrot.slane %v169, %v211
      %v213 = vlaneseq
      %v214 = vshrl.u32 %v213, 7
      %v215 = vsub.s32 5, %v214
      %v216 = vrot.slane %v169, %v215
      %v219 = vlaneseq
      %v220 = vshrl.u32 %v219, 7
      %v221 = vsub.s32 1, %v220
      %v222 = vrot.slane %v212, %v221
      %v223 = vlaneseq
      %v224 = vshrl.u32 %v223, 7
      %v225 = vsub.s32 1, %v224
      %v226 = vrot.slane %v216, %v225
      %v227 = vmul.f32 %v207, %v222
      %v228 = vmul.f32 %v207, %v226
      %v229 = vadd.f32 %v203, %v227
      %v230 = vadd.f32 %v204, %v228
      %231 = vset.pattern.permute.xlu0 2
      %232 = vperm.xlu0 %231, %v170
      %v233 = vpop.permute.xlu0 %232
      %v235 = vlaneseq
      %v236 = vshrl.u32 %v235, 7
      %v237 = vsub.s32 2, %v236
      %v238 = vrot.slane %v169, %v237
      %v239 = vlaneseq
      %v240 = vshrl.u32 %v239, 7
      %v241 = vsub.s32 6, %v240
      %v242 = vrot.slane %v169, %v241
      %v245 = vlaneseq
      %v246 = vshrl.u32 %v245, 7
      %v247 = vsub.s32 2, %v246
      %v248 = vrot.slane %v238, %v247
      %v249 = vlaneseq
      %v250 = vshrl.u32 %v249, 7
      %v251 = vsub.s32 2, %v250
      %v252 = vrot.slane %v242, %v251
      %v253 = vmul.f32 %v233, %v248
      %v254 = vmul.f32 %v233, %v252
      %v255 = vadd.f32 %v229, %v253
      %v256 = vadd.f32 %v230, %v254
      %257 = vset.pattern.permute.xlu0 3
      %258 = vperm.xlu0 %257, %v170
      %v259 = vpop.permute.xlu0 %258
      %v261 = vlaneseq
      %v262 = vshrl.u32 %v261, 7
      %v263 = vsub.s32 3, %v262
      %v264 = vrot.slane %v169, %v263
      %v265 = vlaneseq
      %v266 = vshrl.u32 %v265, 7
      %v267 = vsub.s32 7, %v266
      %v268 = vrot.slane %v169, %v267
      %v271 = vlaneseq
      %v272 = vshrl.u32 %v271, 7
      %v273 = vsub.s32 3, %v272
      %v274 = vrot.slane %v264, %v273
      %v275 = vlaneseq
      %v276 = vshrl.u32 %v275, 7
      %v277 = vsub.s32 3, %v276
      %v278 = vrot.slane %v268, %v277
      %v279 = vmul.f32 %v259, %v274
      %v280 = vmul.f32 %v259, %v278
      %v281 = vadd.f32 %v255, %v279
      %v282 = vadd.f32 %v256, %v280
      %284 = vrot.lane.b32.xlu0 %v281, 64
      %v285 = vpop.permute.xlu0 %284
      %v287 = vmax.f32 %v281, %v285
      %v288 = vmax.f32 %v287, %v282
      %290 = vrot.lane.b32.xlu0 %v282, 64
      %v291 = vpop.permute.xlu0 %290
      %v293 = vmax.f32 %v288, %v291
      %vm294 = vcmask 523264
      %295 = vst.msk [vmem:[%s168] sm:$0xff] %vm294, %v293
      %p296 = scmp.lt.s32.totalorder %s14, 1
      %s297 = scalar_select %p296, %s14, 1
      %s298 = smul.addr %s297, 8
      %s299 = scalar_lea.vmem %s3, %s298
      // Predicated region
      $region33: #{nnbase_forward.1} parent=31 // pred_check
        %p300 = pneg %p100
      $region34: #{nnbase_forward.1} parent=31 // pred_check_branch
        %302 = sbr.rel (%p300) target = $region36
      $region35: #{nnbase_forward.1} parent=31 // pred_region
        _
      $region36: #{nnbase_forward.1} parent=31 // pred_fallthru
        _
    $region32: #{nnbase_forward.1} parent=5 // pred_fallthru
      _
    %p303 = scmp.le.s32.totalorder 2, %s9
    // Predicated region
    $region37: #{nnbase_forward.1} parent=5 // pred_check
      %p304 = pneg %p303
    $region38: #{nnbase_forward.1} parent=5 // pred_check_branch
      %306 = sbr.rel (%p304) target = $region40
    $region39: #{nnbase_forward.1} parent=5 // pred_region
      %s307 = ssub.s32 %s9, 2
      // Predicated region
      $region41: #{nnbase_forward.1} parent=39 // pred_check
        %p308 = pneg %p106
      $region42: #{nnbase_forward.1} parent=39 // pred_check_branch
        %310 = sbr.rel (%p308) target = $region44
      $region43: #{nnbase_forward.1} parent=39 // pred_region
        %p311 = scmp.lt.s32.totalorder %s15, 1
        %s312 = scalar_select %p311, %s15, 1
        %s313 = smul.addr %s312, 8
        %s314 = scalar_lea.vmem %s3, %s313
      $region44: #{nnbase_forward.1} parent=39 // pred_fallthru
        _
    $region40: #{nnbase_forward.1} parent=5 // pred_fallthru
      _
  $region6: #{nnbase_forward.1} parent=0 // loop_footer
    %s13 = sadd.s32 1, %s9
  $region7: #{nnbase_forward.1} parent=0 // loop_footer_branch
    %8 = sbr.rel target = $region3
  $region8: #{nnbase_forward.1} parent=0 // loop_exit
    _

</llo_original>
